<compile_context>
chip_gen: v6e
topology: v6e:2x2x1
jax: 0.10.0
libtpu: 0.0.40
codegen_flags: <defaults>
</compile_context>

<pallas_src>
import jax
import jax.numpy as jnp
from jax import lax
from jax.experimental import pallas as pl
from jax.experimental.pallas import tpu as pltpu


def _round_up(x, m):
    return ((x + m - 1) // m) * m


def _cdiv(a, b):
    return -(-a // b)


def _tpu_vmem_capacity_bytes():
    try:
        cap = int(pltpu.get_tpu_info().vmem_capacity_bytes)
        if cap > 0:
            return cap
    except Exception:
        pass
    return 128 * 1024 * 1024


def _num_tensorcores():
    # Best-effort TensorCore count (v7x: 2 per chip, v5e/v6e: 1).  Falls back to
    # 1, which is always correct (the "parallel" chunk axis is then size 1).
    try:
        info = pltpu.get_tpu_info()
        for name in ("num_cores", "core_count", "num_tensorcores",
                     "tensorcore_count", "tensor_cores_per_chip"):
            v = getattr(info, name, None)
            if v is None:
                continue
            try:
                v = int(v)
            except Exception:
                continue
            if v > 0:
                return v
    except Exception:
        pass
    try:
        v = getattr(jax.devices()[0], "num_cores", None)
        if v is not None and int(v) > 0:
            return int(v)
    except Exception:
        pass
    return 1


def _best_fold(M, NY, max_lanes=128):
    # Largest divisor G of M with G*NY <= max_lanes: folding G rows into the
    # lane axis is a *free* reshape (row-major contiguous), so lanes stay dense
    # with zero extra HBM traffic.  Falls back to G=1 for awkward (prime) M.
    if NY >= max_lanes:
        return 1
    gmax = min(M, max_lanes // NY)
    best = 1
    for g in range(1, gmax + 1):
        if M % g == 0:
            best = g
    return best


def _make_mse_kernel(TM, SUB, W, Q_valid, NT):
    n_sub = TM // SUB

    def kernel(p_ref, t_ref, sq_ref, cnt_ref):
        j = pl.program_id(1)

        @pl.when(j == 0)
        def _init():
            sq_ref[...] = jnp.zeros_like(sq_ref)
            cnt_ref[...] = jnp.zeros_like(cnt_ref)

        # Global folded-row offset of this tile (UNclamped, so duplicated
        # trailing steps and edge-tile garbage rows fail the row mask below).
        row0 = (pl.program_id(0) * NT + j) * TM
        row_iota = lax.broadcasted_iota(jnp.int32, (SUB, W), 0)  # hoisted

        def body(s, carry):
            base = pl.multiple_of(s * SUB, SUB)
            t = t_ref[pl.ds(base, SUB), :].astype(jnp.float32)
            p = p_ref[pl.ds(base, SUB), :].astype(jnp.float32)
            rows = row0 + base + row_iota
            # NaN self-mask AND row-validity mask (handles OOB / padded rows).
            mask = (t == t) & (rows < Q_valid)
            d = jnp.where(mask, p - t, jnp.float32(0.0))
            # Per-sublane partials: only add across vreg groups (VPU adds, no
            # cross-sublane XLU reduce); final 8 -> 1 reduce happens in JAX.
            sq_ref[...] += jnp.sum((d * d).reshape(SUB // 8, 8, W), axis=0)
            cnt_ref[...] += jnp.sum(
                mask.astype(jnp.float32).reshape(SUB // 8, 8, W), axis=0)
            return carry

        lax.fori_loop(0, n_sub, body, 0, unroll=(n_sub <= 8))

    return kernel


def mse_loss(output, target, *, tm_target=8192, num_parallel=None):
    """output, target: (B, C, NY) float arrays.  Returns scalar float32 loss."""
    assert output.shape == target.shape
    B, C, NY = output.shape
    M = B * C

    # Free reshapes only: rows = (b, c) groups, lanes = folded (g, k).
    G = _best_fold(M, NY)
    W = G * NY
    Q = M // G                      # folded rows actually containing data
    p_f = output.reshape(Q, W)
    t_f = target.reshape(Q, W)

    # Degenerate tiny inputs: guarantee at least 8 folded rows so the row block
    # can be a multiple of 8.  (Only ever copies a handful of rows.)
    if Q < 8:
        p_f = jnp.pad(p_f, ((0, 8 - Q), (0, 0)))
        t_f = jnp.pad(t_f, ((0, 8 - Q), (0, 0)))
        Q_arr = 8
    else:
        Q_arr = Q

    itemsize = max(jnp.dtype(output.dtype).itemsize,
                   jnp.dtype(target.dtype).itemsize)
    W_lane = _round_up(W, 128)      # VMEM lane footprint of one row

    # Generation-aware VMEM budgeting (v7x: 64 MiB/TC, v5e/v6e: 128 MiB).
    vmem_cap = _tpu_vmem_capacity_bytes()
    if vmem_cap <= 64 * 1024 * 1024:
        buf_budget = 28 * 1024 * 1024     # 2 inputs x 2 pipeline buffers
        vmem_limit = 48 * 1024 * 1024
    else:
        buf_budget = 48 * 1024 * 1024
        vmem_limit = 64 * 1024 * 1024

    # Inner sub-block rows: keep each f32 temporary <= ~1 MiB in VMEM.
    SUB = max(8, min(1024, (1024 * 1024 // (W_lane * 4)) // 8 * 8))

    # Row-tile size: bounded by the buffer budget and the (rounded) row extent.
    tm_cap = max(8, (buf_budget // (4 * W_lane * itemsize)) // 8 * 8)
    TM = max(8, min(_round_up(tm_target, 8), tm_cap, (Q_arr // 8) * 8))
    if TM >= SUB:
        TM = (TM // SUB) * SUB
    else:
        SUB = TM

    n_tiles = _cdiv(Q_arr, TM)
    NP = num_parallel if num_parallel is not None else _num_tensorcores()
    NP = max(1, min(NP, n_tiles))
    NT = _cdiv(n_tiles, NP)

    def in_map(i, j):
        # Clamp so a (rare) duplicated trailing step re-reads the last tile;
        # the kernel's row mask zeroes its contribution.
        return (jnp.minimum(i * NT + j, n_tiles - 1), 0)

    def out_map(i, j):
        return (i, 0, 0)

    kernel = _make_mse_kernel(TM, SUB, W, Q, NT)

    sq_parts, cnt_parts = pl.pallas_call(
        kernel,
        out_shape=(
            jax.ShapeDtypeStruct((NP, 8, W), jnp.float32),
            jax.ShapeDtypeStruct((NP, 8, W), jnp.float32),
        ),
        grid_spec=pltpu.PrefetchScalarGridSpec(
            num_scalar_prefetch=0,
            grid=(NP, NT),
            in_specs=[
                pl.BlockSpec((TM, W), in_map),
                pl.BlockSpec((TM, W), in_map),
            ],
            out_specs=[
                pl.BlockSpec((None, 8, W), out_map),
                pl.BlockSpec((None, 8, W), out_map),
            ],
        ),
        compiler_params=pltpu.CompilerParams(
            dimension_semantics=("parallel", "arbitrary"),
            vmem_limit_bytes=vmem_limit,
        ),
    )(p_f, t_f)

    # Tiny finalize in plain JAX: combine per-chunk / per-sublane partials,
    # un-fold lanes back to (G, NY), divide, and sum over k.  All-NaN k slices
    # yield 0/0 = NaN, matching PyTorch's mean over an empty selection.
    sq = jnp.sum(sq_parts, axis=(0, 1)).reshape(G, NY).sum(axis=0)    # (NY,)
    cnt = jnp.sum(cnt_parts, axis=(0, 1)).reshape(G, NY).sum(axis=0)  # (NY,)
    return jnp.sum(sq / cnt)


def _reference(output, target):
    # Pure-JAX reference mirroring the PyTorch loop.
    out = jnp.asarray(output, jnp.float32)
    tgt = jnp.asarray(target, jnp.float32)
    ny = tgt.shape[2]
    total = jnp.float32(0.0)
    for k in range(ny):
        p0 = out[:, :, k]
        t0 = tgt[:, :, k]
        mask = t0 == t0
        d2 = jnp.where(mask, (p0 - t0) ** 2, 0.0)
        total = total + jnp.sum(d2) / jnp.sum(mask.astype(jnp.float32))
    return total


if __name__ == "__main__":
    key = jax.random.PRNGKey(0)
    ks = jax.random.split(key, 6)

    # Case 1: module-sized small input with NaNs injected into the target.
    B, C, NY = 2, 4, 8
    out1 = jax.random.normal(ks[0], (B, C, NY), dtype=jnp.float32)
    tgt1 = jax.random.normal(ks[1], (B, C, NY), dtype=jnp.float32)
    tgt1 = tgt1.at[0, 1, 3].set(jnp.nan)
    tgt1 = tgt1.at[1, 2, 5].set(jnp.nan)
    tgt1 = tgt1.at[1, 0, 3].set(jnp.nan)
    l1 = jax.block_until_ready(mse_loss(out1, tgt1))
    r1 = jax.block_until_ready(_reference(out1, tgt1))
    assert jnp.allclose(l1, r1, rtol=1e-5, atol=1e-5), (l1, r1)

    # Case 2: NY that does not divide 128 and non-power-of-two row count
    # (exercises non-128 lane width and the tiny-Q padding fallback).
    B2, C2, NY2 = 3, 7, 5
    out2 = jax.random.normal(ks[2], (B2, C2, NY2), dtype=jnp.float32)
    tgt2 = jax.random.normal(ks[3], (B2, C2, NY2), dtype=jnp.float32)
    tgt2 = tgt2.at[2, 6, 2].set(jnp.nan)
    tgt2 = tgt2.at[0, 0, 4].set(jnp.nan)
    l2 = jax.block_until_ready(mse_loss(out2, tgt2))
    r2 = jax.block_until_ready(_reference(out2, tgt2))
    assert jnp.allclose(l2, r2, rtol=1e-5, atol=1e-5), (l2, r2)

    # Case 3: multi-tile reduction axis + two parallel chunks (exercises the
    # resident accumulators, edge-tile row masking and the partial combine).
    B3, C3, NY3 = 8, 250, 8        # M = 2000 rows -> G = 16, W = 128, Q = 125
    out3 = jax.random.normal(ks[4], (B3, C3, NY3), dtype=jnp.float32)
    tgt3 = jax.random.normal(ks[5], (B3, C3, NY3), dtype=jnp.float32)
    tgt3 = tgt3.at[5, 100, 1].set(jnp.nan)
    tgt3 = tgt3.at[7, 249, 7].set(jnp.nan)
    l3 = jax.block_until_ready(mse_loss(out3, tgt3, tm_target=32, num_parallel=2))
    r3 = jax.block_until_ready(_reference(out3, tgt3))
    assert jnp.allclose(l3, r3, rtol=1e-5, atol=1e-5), (l3, r3)

    print("KERNEL_OK")
</pallas_src>

<mosaic_0001>
module attributes {stable_mosaic.version = 11 : i64} {
  func.func @kernel(%arg0: i32, %arg1: i32, %arg2: memref<8x64xf32, #tpu.memory_space<vmem>>, %arg3: memref<8x64xf32, #tpu.memory_space<vmem>>, %arg4: memref<1x8x64xf32, #tpu.memory_space<vmem>>, %arg5: memref<1x8x64xf32, #tpu.memory_space<vmem>>) attributes {dimension_semantics = [#tpu.dimension_semantics<parallel>, #tpu.dimension_semantics<arbitrary>], iteration_bounds = array<i64: 1, 1>, scalar_prefetch = 0 : i64, scratch_operands = 0 : i64, tpu.core_type = #tpu.core_type<tc>, window_params = [{transform_indices = @transform_0, window_bounds = array<i64: 8, 64>}, {transform_indices = @transform_1, window_bounds = array<i64: 8, 64>}, {transform_indices = @transform_2, window_bounds = array<i64: 1, 8, 64>}, {transform_indices = @transform_3, window_bounds = array<i64: 1, 8, 64>}]} {
    %c0_i32 = arith.constant 0 : i32
    %0 = arith.cmpi eq, %arg1, %c0_i32 : i32
    %1 = arith.extui %0 : i1 to i32
    %c0_i32_0 = arith.constant 0 : i32
    %2 = arith.cmpi ne, %1, %c0_i32_0 : i32
    scf.if %2 {
      %cst_20 = arith.constant 0.000000e+00 : f32
      %42 = vector.broadcast %cst_20 : f32 to vector<8x64xf32>
      %c0_21 = arith.constant 0 : index
      %c0_22 = arith.constant 0 : index
      %c0_23 = arith.constant 0 : index
      %43 = vector.load %arg4[%c0_21, %c0_22, %c0_23] : memref<1x8x64xf32, #tpu.memory_space<vmem>>, vector<1x8x64xf32>
      %44 = vector.shape_cast %43 : vector<1x8x64xf32> to vector<8x64xf32>
      %45 = vector.shape_cast %42 : vector<8x64xf32> to vector<1x8x64xf32>
      tpu.vector_store %arg4[%c0_21, %c0_22, %c0_23], %45 {strides = array<i32>} : memref<1x8x64xf32, #tpu.memory_space<vmem>>, vector<1x8x64xf32>,
      %cst_24 = arith.constant 0.000000e+00 : f32
      %46 = vector.broadcast %cst_24 : f32 to vector<8x64xf32>
      %c0_25 = arith.constant 0 : index
      %c0_26 = arith.constant 0 : index
      %c0_27 = arith.constant 0 : index
      %47 = vector.load %arg5[%c0_25, %c0_26, %c0_27] : memref<1x8x64xf32, #tpu.memory_space<vmem>>, vector<1x8x64xf32>
      %48 = vector.shape_cast %47 : vector<1x8x64xf32> to vector<8x64xf32>
      %49 = vector.shape_cast %46 : vector<8x64xf32> to vector<1x8x64xf32>
      tpu.vector_store %arg5[%c0_25, %c0_26, %c0_27], %49 {strides = array<i32>} : memref<1x8x64xf32, #tpu.memory_space<vmem>>, vector<1x8x64xf32>,
    } else {
    }
    %c1_i32 = arith.constant 1 : i32
    %3 = arith.muli %arg0, %c1_i32 : i32
    %4 = arith.addi %3, %arg1 : i32
    %c8_i32 = arith.constant 8 : i32
    %5 = arith.muli %4, %c8_i32 : i32
    %6 = tpu.iota {dimensions = array<i32: 0>} : vector<8x64xi32>
    %c0_i32_1 = arith.constant 0 : i32
    %c8_i32_2 = arith.constant 8 : i32
    %7 = arith.muli %c0_i32_1, %c8_i32_2 : i32
    %8 = tpu.assume_multiple %7, 8 : i32
    %9 = arith.index_cast %8 : i32 to index
    %c0 = arith.constant 0 : index
    %10 = vector.load %arg3[%9, %c0] : memref<8x64xf32, #tpu.memory_space<vmem>>, vector<8x64xf32>
    %11 = arith.index_cast %8 : i32 to index
    %c0_3 = arith.constant 0 : index
    %12 = vector.load %arg2[%11, %c0_3] : memref<8x64xf32, #tpu.memory_space<vmem>>, vector<8x64xf32>
    %13 = arith.addi %5, %8 : i32
    %14 = vector.broadcast %13 : i32 to vector<8x64xi32>
    %15 = arith.addi %14, %6 : vector<8x64xi32>
    %16 = arith.cmpf oeq, %10, %10 : vector<8x64xf32>
    %c1_i32_4 = arith.constant 1 : i32
    %17 = vector.broadcast %c1_i32_4 : i32 to vector<8x64xi32>
    %18 = arith.cmpi slt, %15, %17 : vector<8x64xi32>
    %19 = arith.andi %16, %18 : vector<8x64xi1>
    %20 = arith.subf %12, %10 : vector<8x64xf32>
    %cst = arith.constant 0.000000e+00 : f32
    %21 = vector.broadcast %cst : f32 to vector<8x64xf32>
    %22 = arith.select %19, %20, %21 : vector<8x64xi1>, vector<8x64xf32>
    %c0_5 = arith.constant 0 : index
    %c0_6 = arith.constant 0 : index
    %c0_7 = arith.constant 0 : index
    %23 = vector.load %arg4[%c0_5, %c0_6, %c0_7] : memref<1x8x64xf32, #tpu.memory_space<vmem>>, vector<1x8x64xf32>
    %24 = vector.shape_cast %23 : vector<1x8x64xf32> to vector<8x64xf32>
    %25 = arith.mulf %22, %22 : vector<8x64xf32>
    %26 = vector.shape_cast %25 : vector<8x64xf32> to vector<1x8x64xf32>
    %cst_8 = arith.constant dense<0.000000e+00> : vector<8x64xf32>
    %27 = vector.multi_reduction <add>, %26, %cst_8 [0] : vector<1x8x64xf32> to vector<8x64xf32>
    %28 = arith.addf %24, %27 : vector<8x64xf32>
    %c0_9 = arith.constant 0 : index
    %c0_10 = arith.constant 0 : index
    %c0_11 = arith.constant 0 : index
    %29 = vector.load %arg4[%c0_9, %c0_10, %c0_11] : memref<1x8x64xf32, #tpu.memory_space<vmem>>, vector<1x8x64xf32>
    %30 = vector.shape_cast %29 : vector<1x8x64xf32> to vector<8x64xf32>
    %31 = vector.shape_cast %28 : vector<8x64xf32> to vector<1x8x64xf32>
    tpu.vector_store %arg4[%c0_9, %c0_10, %c0_11], %31 {strides = array<i32>} : memref<1x8x64xf32, #tpu.memory_space<vmem>>, vector<1x8x64xf32>,
    %c0_12 = arith.constant 0 : index
    %c0_13 = arith.constant 0 : index
    %c0_14 = arith.constant 0 : index
    %32 = vector.load %arg5[%c0_12, %c0_13, %c0_14] : memref<1x8x64xf32, #tpu.memory_space<vmem>>, vector<1x8x64xf32>
    %33 = vector.shape_cast %32 : vector<1x8x64xf32> to vector<8x64xf32>
    %34 = arith.extui %19 : vector<8x64xi1> to vector<8x64xi32>
    %35 = arith.sitofp %34 : vector<8x64xi32> to vector<8x64xf32>
    %36 = vector.shape_cast %35 : vector<8x64xf32> to vector<1x8x64xf32>
    %cst_15 = arith.constant dense<0.000000e+00> : vector<8x64xf32>
    %37 = vector.multi_reduction <add>, %36, %cst_15 [0] : vector<1x8x64xf32> to vector<8x64xf32>
    %38 = arith.addf %33, %37 : vector<8x64xf32>
    %c0_16 = arith.constant 0 : index
    %c0_17 = arith.constant 0 : index
    %c0_18 = arith.constant 0 : index
    %39 = vector.load %arg5[%c0_16, %c0_17, %c0_18] : memref<1x8x64xf32, #tpu.memory_space<vmem>>, vector<1x8x64xf32>
    %40 = vector.shape_cast %39 : vector<1x8x64xf32> to vector<8x64xf32>
    %41 = vector.shape_cast %38 : vector<8x64xf32> to vector<1x8x64xf32>
    tpu.vector_store %arg5[%c0_16, %c0_17, %c0_18], %41 {strides = array<i32>} : memref<1x8x64xf32, #tpu.memory_space<vmem>>, vector<1x8x64xf32>,
    %c1_i32_19 = arith.constant 1 : i32
    return
  }
  func.func @transform_0(%arg0: i32, %arg1: i32) -> (i32, i32) {
    %c1_i32 = arith.constant 1 : i32
    %0 = arith.muli %arg0, %c1_i32 : i32
    %1 = arith.addi %0, %arg1 : i32
    %c0_i32 = arith.constant 0 : i32
    %2 = arith.minsi %1, %c0_i32 : i32
    %c0_i32_0 = arith.constant 0 : i32
    %c0_i32_1 = arith.constant 0 : i32
    return %2, %c0_i32_0 : i32, i32
  }
  func.func @transform_1(%arg0: i32, %arg1: i32) -> (i32, i32) {
    %c1_i32 = arith.constant 1 : i32
    %0 = arith.muli %arg0, %c1_i32 : i32
    %1 = arith.addi %0, %arg1 : i32
    %c0_i32 = arith.constant 0 : i32
    %2 = arith.minsi %1, %c0_i32 : i32
    %c0_i32_0 = arith.constant 0 : i32
    %c0_i32_1 = arith.constant 0 : i32
    return %2, %c0_i32_0 : i32, i32
  }
  func.func @transform_2(%arg0: i32, %arg1: i32) -> (i32, i32, i32) {
    %c0_i32 = arith.constant 0 : i32
    %c0_i32_0 = arith.constant 0 : i32
    %c0_i32_1 = arith.constant 0 : i32
    return %arg0, %c0_i32, %c0_i32_0 : i32, i32, i32
  }
  func.func @transform_3(%arg0: i32, %arg1: i32) -> (i32, i32, i32) {
    %c0_i32 = arith.constant 0 : i32
    %c0_i32_0 = arith.constant 0 : i32
    %c0_i32_1 = arith.constant 0 : i32
    return %arg0, %c0_i32, %c0_i32_0 : i32, i32, i32
  }
}

</mosaic_0001>

<llo_original>
// kernel: tpu_custom_call.1
$region0: #{tpu_custom_call.1}
  #allocation0 [shape = 'u32[]', space=smem, size = 0x4, offset = 0x4, fixed_abs, tag = 'smem constant byte address 0x4 - core index']
  #allocation1 [shape = 'u32[144,128]{1,0:T(1,128)}', space=vmem, size = 0x12000, scoped, tag = 'internal scratch']
  %s0 = inlined_call_operand.hbm [shape: f32[8,64], index: 0, kind: input, shape index: {}]
  %s1 = inlined_call_operand.hbm [shape: f32[8,64], index: 1, kind: input, shape index: {}]
  %s2 = inlined_call_operand.hbm [shape: f32[1,8,64], index: 2, kind: output, shape index: {0}]
  %s3 = inlined_call_operand.hbm [shape: f32[1,8,64], index: 3, kind: output, shape index: {1}]
  %4 = xla_tuple %s2, %s3
  %s5 = sld [smem:[#allocation0]]
  $region38: #{tpu_custom_call.1} parent=0
    _
  %s7 = ssub.s32 1, %s5
  %s8 = scalar_select 0, %s7, %s5
  $region1: #{tpu_custom_call.1} parent=0
    #allocation2 [shape = 'u8[4096]{0}', space=vmem, size = 0x1000, scoped, tag = 'input window, operand 0, single buffered']
    #allocation3 [shape = 's32[1]{0}', space=sflag, size = 0x4, scoped, tag = 'scoped memory for tpu_custom_call.1']
    #allocation4 [shape = 's32[1]{0}', space=sflag, size = 0x4, scoped, tag = 'scoped memory for tpu_custom_call.1']
    #allocation5 [shape = 'u8[4096]{0}', space=vmem, size = 0x1000, scoped, tag = 'input window, operand 1, single buffered']
    #allocation6 [shape = 's32[1]{0}', space=sflag, size = 0x4, scoped, tag = 'scoped memory for tpu_custom_call.1']
    #allocation7 [shape = 'u8[4096]{0}', space=vmem, size = 0x1000, scoped, tag = 'output window, operand 0, single buffered']
    #allocation8 [shape = 'u8[4096]{0}', space=vmem, size = 0x1000, scoped, tag = 'output window, operand 1, single buffered']
    #allocation9 [shape = 's32[1]{0}', space=sflag, size = 0x4, scoped, tag = 'scoped memory for tpu_custom_call.1']
    %9 = vsyncpa [#allocation3], 0
    %10 = vsyncpa [#allocation6], 0
    %11 = vsyncpa [#allocation4], 0
    %12 = vsyncpa [#allocation9], 0
    // Predicated region
    $region2: #{tpu_custom_call.1} parent=1 // pred_check
      _
    $region3: #{tpu_custom_call.1} parent=1 // pred_check_branch
      %14 = sbr.rel (0) target = $region5
    $region4: #{tpu_custom_call.1} parent=1 // pred_region
      %s15 = sadd.s32 0, 0
      %p16 = scmp.lt.s32.totalorder %s15, 0
      %s17 = scalar_select %p16, %s15, 0
      %s19 = ssub.s32 128, 128
      %20 = vsyncadd [#allocation3], %s19
      %s21 = smul.addr %s17, 128
      %s22 = scalar_lea.hbm %s0, %s21
      %s24 = sshll.u32 [#allocation2], 4
      %s25 = int_to_ptr.vmem [resolvable:$true] %s24
      %27 = dma.hbm_to_vmem [thread:$0]  %s22, 128, %s25, [#allocation3]
    $region5: #{tpu_custom_call.1} parent=1 // pred_fallthru
      _
    // Predicated region
    $region6: #{tpu_custom_call.1} parent=1 // pred_check
      _
    $region7: #{tpu_custom_call.1} parent=1 // pred_check_branch
      %29 = sbr.rel (0) target = $region9
    $region8: #{tpu_custom_call.1} parent=1 // pred_region
      %s30 = sadd.s32 0, 0
      %p31 = scmp.lt.s32.totalorder %s30, 0
      %s32 = scalar_select %p31, %s30, 0
      %s34 = ssub.s32 128, 128
      %35 = vsyncadd [#allocation6], %s34
      %s36 = smul.addr %s32, 128
      %s37 = scalar_lea.hbm %s1, %s36
      %s39 = sshll.u32 [#allocation5], 4
      %s40 = int_to_ptr.vmem [resolvable:$true] %s39
      %42 = dma.hbm_to_vmem [thread:$0]  %s37, 128, %s40, [#allocation6]
    $region9: #{tpu_custom_call.1} parent=1 // pred_fallthru
      _
    // Predicated region
    $region10: #{tpu_custom_call.1} parent=1 // pred_check
      _
    $region11: #{tpu_custom_call.1} parent=1 // pred_check_branch
      %44 = sbr.rel (0) target = $region13
    $region12: #{tpu_custom_call.1} parent=1 // pred_region
      %45 = dma.done [#allocation3], 128
    $region13: #{tpu_custom_call.1} parent=1 // pred_fallthru
      _
    // Predicated region
    $region14: #{tpu_custom_call.1} parent=1 // pred_check
      _
    $region15: #{tpu_custom_call.1} parent=1 // pred_check_branch
      %47 = sbr.rel (0) target = $region17
    $region16: #{tpu_custom_call.1} parent=1 // pred_region
      %48 = dma.done [#allocation6], 128
    $region17: #{tpu_custom_call.1} parent=1 // pred_fallthru
      _
    %s49 = sadd.s32 0, 0
    %p50 = scmp.lt.s32.totalorder %s49, 0
    %s51 = scalar_select %p50, %s49, 0
    %s52 = sadd.s32 0, 0
    %p53 = scmp.lt.s32.totalorder %s52, 0
    %s54 = scalar_select %p53, %s52, 0
    %p55 = scmp.eq.s32.totalorder 0, 0
    // Predicated region
    $region18: #{tpu_custom_call.1} parent=1 // pred_check
      %p56 = pneg %p55
    $region19: #{tpu_custom_call.1} parent=1 // pred_check_branch
      %58 = sbr.rel (%p56) target = $region21
    $region20: #{tpu_custom_call.1} parent=1 // pred_region
      %vm59 = vcmask 523264
      %60 = vst.msk [vmem:[#allocation7] sm:$0xff] %vm59, 0.0
      %61 = vst.msk [vmem:[#allocation8] sm:$0xff] %vm59, 0.0
    $region21: #{tpu_custom_call.1} parent=1 // pred_fallthru
      _
    %s62 = sadd.s32 0, 0
    %s63 = smul.u32 %s62, 8
    %v64 = vlaneseq
    %v65 = vshrl.u32 %v64, 7
    %v66 = vld [vmem:[#allocation5] sm:$0xff]
    %v67 = vld [vmem:[#allocation2] sm:$0xff]
    %s68 = sadd.s32 %s63, 0
    %v69 = vstv %s68
    %v70 = vadd.s32 %v69, %v65
    %vm71 = vcmp.eq.f32.partialorder %v66, %v66
    %vm72 = vcmp.lt.s32.totalorder %v70, 1
    %vm73 = vmand %vm71, %vm72
    %v74 = vsub.f32 %v67, %v66
    %v75 = vsel %vm73, %v74, 0.0
    %v76 = vld [vmem:[#allocation7] sm:$0xff]
    %v77 = vmul.f32 %v75, %v75
    %v78 = vadd.f32 %v77, 0.0
    %v79 = vadd.f32 %v76, %v78
    %vm80 = vcmask 523264
    %81 = vst.msk [vmem:[#allocation7] sm:$0xff] %vm80, %v79
    %v82 = vld [vmem:[#allocation8] sm:$0xff]
    %v83 = vsel %vm73, 1, 0
    %v84 = vcvt.s32.f32 %v83
    %v85 = vadd.f32 %v84, 0.0
    %v86 = vadd.f32 %v82, %v85
    %87 = vst.msk [vmem:[#allocation8] sm:$0xff] %vm80, %v86
    // Predicated region
    $region22: #{tpu_custom_call.1} parent=1 // pred_check
      _
    $region23: #{tpu_custom_call.1} parent=1 // pred_check_branch
      %89 = sbr.rel (0) target = $region25
    $region24: #{tpu_custom_call.1} parent=1 // pred_region
      %s91 = ssub.s32 128, 128
      %92 = vsyncadd [#allocation4], %s91
      %s94 = sshll.u32 [#allocation7], 4
      %s95 = int_to_ptr.vmem [resolvable:$true] %s94
      %97 = dma.vmem_to_hbm [thread:$0]  %s95, 128, %s2, [#allocation4]
    $region25: #{tpu_custom_call.1} parent=1 // pred_fallthru
      _
    // Predicated region
    $region26: #{tpu_custom_call.1} parent=1 // pred_check
      _
    $region27: #{tpu_custom_call.1} parent=1 // pred_check_branch
      %99 = sbr.rel (0) target = $region29
    $region28: #{tpu_custom_call.1} parent=1 // pred_region
      %s101 = ssub.s32 128, 128
      %102 = vsyncadd [#allocation9], %s101
      %s104 = sshll.u32 [#allocation8], 4
      %s105 = int_to_ptr.vmem [resolvable:$true] %s104
      %107 = dma.vmem_to_hbm [thread:$0]  %s105, 128, %s3, [#allocation9]
    $region29: #{tpu_custom_call.1} parent=1 // pred_fallthru
      _
    // Predicated region
    $region30: #{tpu_custom_call.1} parent=1 // pred_check
      _
    $region31: #{tpu_custom_call.1} parent=1 // pred_check_branch
      %109 = sbr.rel (0) target = $region33
    $region32: #{tpu_custom_call.1} parent=1 // pred_region
      %110 = dma.done [#allocation4], 128
    $region33: #{tpu_custom_call.1} parent=1 // pred_fallthru
      _
    // Predicated region
    $region34: #{tpu_custom_call.1} parent=1 // pred_check
      _
    $region35: #{tpu_custom_call.1} parent=1 // pred_check_branch
      %112 = sbr.rel (0) target = $region37
    $region36: #{tpu_custom_call.1} parent=1 // pred_region
      %113 = dma.done [#allocation9], 128
    $region37: #{tpu_custom_call.1} parent=1 // pred_fallthru
      _
    %114 = vsyncpa [#allocation3], 1
    %115 = vsyncpa [#allocation6], 1
    %116 = vsyncpa [#allocation4], 1
    %117 = vsyncpa [#allocation9], 1

</llo_original>
